<compile_context>
chip_gen: v7x
topology: tpu7x:2x2x1
jax: 0.10.0
libtpu: 0.0.40
codegen_flags: <defaults>
</compile_context>

<pallas_src>
import jax
import jax.numpy as jnp
from jax.experimental import pallas as pl
from jax.experimental.pallas import tpu as pltpu


def _round_up(x, m):
    return ((x + m - 1) // m) * m


def make_contrastive_loss_kernel(margin, eps=1e-9, size_average=True,
                                 tile_rows=512):
    """Returns a callable (output1, output2, target) -> scalar loss."""
    margin = float(margin)
    eps = float(eps)

    def wrapper(output1, output2, target):
        assert output1.shape == output2.shape and output1.ndim == 2
        B, D = output1.shape
        TB = min(int(tile_rows), _round_up(B, 8))   # sublane-aligned tile
        num_tiles = pl.cdiv(B, TB)

        # target is tiny (B values): reshape/cast in the wrapper is negligible.
        t = target.reshape(B, 1).astype(jnp.float32)

        def kernel(o1_ref, o2_ref, t_ref, out_ref):
            # Cast after the DMA -> HBM traffic stays at the native input width.
            o1 = o1_ref[...].astype(jnp.float32)
            o2 = o2_ref[...].astype(jnp.float32)
            diff = o2 - o1                                        # (TB, D)
            # Row reduction. Kernel is mem-bound, XLU reduce is fine; switch to
            # an MXU matvec (jnp.dot(diff*diff, ones((D,1)))) only if profiling
            # ever shows the XLU slot binding.
            dist = jnp.sum(diff * diff, axis=1, keepdims=True)    # (TB, 1)
            t_blk = t_ref[...]                                    # (TB, 1)
            hinge = jnp.maximum(margin - jnp.sqrt(dist + eps), 0.0)
            losses = 0.5 * (t_blk * dist + (1.0 - t_blk) * hinge * hinge)
            # Mask rows beyond the true batch (partial last tile may read
            # padded/unspecified data); select keeps any garbage from leaking.
            row = (pl.program_id(0) * TB
                   + jax.lax.broadcasted_iota(jnp.int32, (TB, 1), 0))
            out_ref[...] = jnp.where(row < B, losses, 0.0)

        in_bytes = jnp.dtype(output1.dtype).itemsize
        # Double-buffered input tiles dominate VMEM usage; add headroom, cap at
        # v7x's 64 MiB physical VMEM.
        vmem_est = 2 * 2 * TB * D * in_bytes + 4 * TB * 4 + 4 * TB * 4
        vmem_limit = int(min(64 * 1024 * 1024,
                             max(32 * 1024 * 1024, 2 * vmem_est)))

        cost = pl.CostEstimate(
            flops=int(3 * B * D + 8 * B),
            transcendentals=int(B),                      # one sqrt per row
            bytes_accessed=int(2 * B * D * in_bytes + 4 * B + 4 * B),
        )

        per_row = pl.pallas_call(
            kernel,
            out_shape=jax.ShapeDtypeStruct((B, 1), jnp.float32),
            grid=(num_tiles,),
            in_specs=[
                pl.BlockSpec((TB, D), lambda i: (i, 0)),
                pl.BlockSpec((TB, D), lambda i: (i, 0)),
                pl.BlockSpec((TB, 1), lambda i: (i, 0)),
            ],
            out_specs=pl.BlockSpec((TB, 1), lambda i: (i, 0)),
            compiler_params=pltpu.CompilerParams(
                dimension_semantics=("parallel",),
                vmem_limit_bytes=vmem_limit,
            ),
            cost_estimate=cost,
        )(output1, output2, t)

        total = jnp.sum(per_row)
        return total / B if size_average else total

    return wrapper


def contrastive_loss_ref(output1, output2, target, margin, eps=1e-9,
                         size_average=True):
    """Plain-JAX reference mirroring the PyTorch module."""
    distances = jnp.sum((output2.astype(jnp.float32)
                         - output1.astype(jnp.float32)) ** 2, axis=1)
    hinge = jnp.maximum(margin - jnp.sqrt(distances + eps), 0.0)
    tf = target.astype(jnp.float32)
    losses = 0.5 * (tf * distances + (1.0 - tf) * hinge ** 2)
    return jnp.mean(losses) if size_average else jnp.sum(losses)


if __name__ == "__main__":
    # Small shapes consistent with the module: embedding pairs + binary labels.
    B, D = 8, 32
    margin = 1.0

    key = jax.random.PRNGKey(0)
    k1, k2, k3 = jax.random.split(key, 3)
    output1 = jax.random.normal(k1, (B, D), dtype=jnp.float32)
    output2 = jax.random.normal(k2, (B, D), dtype=jnp.float32)
    target = jax.random.bernoulli(k3, 0.5, (B,)).astype(jnp.int32)

    loss_fn = make_contrastive_loss_kernel(margin=margin)
    loss = jax.block_until_ready(loss_fn(output1, output2, target))

    ref = jax.block_until_ready(
        contrastive_loss_ref(output1, output2, target, margin))

    assert jnp.allclose(loss, ref, rtol=1e-5, atol=1e-5), (loss, ref)
    print("KERNEL_OK")
</pallas_src>

<mosaic_0001>
module attributes {stable_mosaic.version = 11 : i64} {
  func.func @kernel(%arg0: i32, %arg1: memref<8x32xf32, #tpu.memory_space<vmem>>, %arg2: memref<8x32xf32, #tpu.memory_space<vmem>>, %arg3: memref<8x1xf32, #tpu.memory_space<vmem>>, %arg4: memref<8x1xf32, #tpu.memory_space<vmem>>) attributes {dimension_semantics = [#tpu.dimension_semantics<parallel>], iteration_bounds = array<i64: 1>, scalar_prefetch = 0 : i64, scratch_operands = 0 : i64, tpu.core_type = #tpu.core_type<tc>, window_params = [{transform_indices = @transform_0, window_bounds = array<i64: 8, 32>}, {transform_indices = @transform_1, window_bounds = array<i64: 8, 32>}, {transform_indices = @transform_2, window_bounds = array<i64: 8, 1>}, {transform_indices = @transform_3, window_bounds = array<i64: 8, 1>}]} {
    %c0 = arith.constant 0 : index
    %c0_0 = arith.constant 0 : index
    %0 = vector.load %arg1[%c0, %c0_0] : memref<8x32xf32, #tpu.memory_space<vmem>>, vector<8x32xf32>
    %c0_1 = arith.constant 0 : index
    %c0_2 = arith.constant 0 : index
    %1 = vector.load %arg2[%c0_1, %c0_2] : memref<8x32xf32, #tpu.memory_space<vmem>>, vector<8x32xf32>
    %2 = arith.subf %1, %0 : vector<8x32xf32>
    %3 = arith.mulf %2, %2 : vector<8x32xf32>
    %cst = arith.constant dense<0.000000e+00> : vector<8xf32>
    %4 = vector.multi_reduction <add>, %3, %cst [1] : vector<8x32xf32> to vector<8xf32>
    %5 = vector.shape_cast %4 : vector<8xf32> to vector<8x1xf32>
    %c0_3 = arith.constant 0 : index
    %c0_4 = arith.constant 0 : index
    %6 = vector.load %arg3[%c0_3, %c0_4] : memref<8x1xf32, #tpu.memory_space<vmem>>, vector<8x1xf32>
    %cst_5 = arith.constant 9.99999971E-10 : f32
    %7 = vector.broadcast %cst_5 : f32 to vector<8x1xf32>
    %8 = arith.addf %5, %7 : vector<8x1xf32>
    %9 = math.sqrt %8 : vector<8x1xf32>
    %cst_6 = arith.constant 1.000000e+00 : f32
    %10 = vector.broadcast %cst_6 : f32 to vector<8x1xf32>
    %11 = arith.subf %10, %9 : vector<8x1xf32>
    %cst_7 = arith.constant 0.000000e+00 : f32
    %12 = vector.broadcast %cst_7 : f32 to vector<8x1xf32>
    %13 = arith.maximumf %11, %12 : vector<8x1xf32>
    %14 = arith.mulf %6, %5 : vector<8x1xf32>
    %cst_8 = arith.constant 1.000000e+00 : f32
    %15 = vector.broadcast %cst_8 : f32 to vector<8x1xf32>
    %16 = arith.subf %15, %6 : vector<8x1xf32>
    %17 = arith.mulf %16, %13 : vector<8x1xf32>
    %18 = arith.mulf %17, %13 : vector<8x1xf32>
    %19 = arith.addf %14, %18 : vector<8x1xf32>
    %cst_9 = arith.constant 5.000000e-01 : f32
    %20 = vector.broadcast %cst_9 : f32 to vector<8x1xf32>
    %21 = arith.mulf %20, %19 : vector<8x1xf32>
    %c8_i32 = arith.constant 8 : i32
    %22 = arith.muli %arg0, %c8_i32 : i32
    %23 = tpu.iota {dimensions = array<i32: 0>} : vector<8x1xi32>
    %24 = vector.broadcast %22 : i32 to vector<8x1xi32>
    %25 = arith.addi %24, %23 : vector<8x1xi32>
    %c8_i32_10 = arith.constant 8 : i32
    %26 = vector.broadcast %c8_i32_10 : i32 to vector<8x1xi32>
    %27 = arith.cmpi slt, %25, %26 : vector<8x1xi32>
    %cst_11 = arith.constant 0.000000e+00 : f32
    %28 = vector.broadcast %cst_11 : f32 to vector<8x1xf32>
    %29 = arith.select %27, %21, %28 : vector<8x1xi1>, vector<8x1xf32>
    %c0_12 = arith.constant 0 : index
    %c0_13 = arith.constant 0 : index
    %30 = vector.load %arg4[%c0_12, %c0_13] : memref<8x1xf32, #tpu.memory_space<vmem>>, vector<8x1xf32>
    tpu.vector_store %arg4[%c0_12, %c0_13], %29 {strides = array<i32>} : memref<8x1xf32, #tpu.memory_space<vmem>>, vector<8x1xf32>,
    return
  }
  func.func @transform_0(%arg0: i32) -> (i32, i32) {
    %c0_i32 = arith.constant 0 : i32
    %c0_i32_0 = arith.constant 0 : i32
    return %arg0, %c0_i32 : i32, i32
  }
  func.func @transform_1(%arg0: i32) -> (i32, i32) {
    %c0_i32 = arith.constant 0 : i32
    %c0_i32_0 = arith.constant 0 : i32
    return %arg0, %c0_i32 : i32, i32
  }
  func.func @transform_2(%arg0: i32) -> (i32, i32) {
    %c0_i32 = arith.constant 0 : i32
    %c0_i32_0 = arith.constant 0 : i32
    return %arg0, %c0_i32 : i32, i32
  }
  func.func @transform_3(%arg0: i32) -> (i32, i32) {
    %c0_i32 = arith.constant 0 : i32
    %c0_i32_0 = arith.constant 0 : i32
    return %arg0, %c0_i32 : i32, i32
  }
}

</mosaic_0001>

<llo_original>
// kernel: tpu_custom_call.1
$region0: #{tpu_custom_call.1}
  #allocation0 [shape = 'u32[]', space=smem, size = 0x4, offset = 0x4, fixed_abs, tag = 'smem constant byte address 0x4 - core index']
  #allocation1 [shape = 'u32[144,128]{1,0:T(1,128)}', space=vmem, size = 0x12000, scoped, tag = 'internal scratch']
  %s0 = inlined_call_operand.vmem [shape: f32[8,32], index: 0, kind: input, shape index: {}]
  %s1 = inlined_call_operand.hbm [shape: f32[8,32], index: 1, kind: input, shape index: {}]
  %s2 = inlined_call_operand.vmem [shape: f32[8,1], index: 2, kind: input, shape index: {}]
  %s3 = inlined_call_operand.vmem [shape: f32[8,1], index: 3, kind: output, shape index: {}]
  %s4 = sld [smem:[#allocation0]]
  $region26: #{tpu_custom_call.1} parent=0
    _
  %s6 = ssub.s32 1, %s4
  %s7 = scalar_select 0, %s6, %s4
  $region1: #{tpu_custom_call.1} parent=0
    #allocation2 [shape = 'u8[4096]{0}', space=vmem, size = 0x1000, scoped, tag = 'input window, operand 1, single buffered']
    #allocation3 [shape = 's32[1]{0}', space=sflag, size = 0x4, scoped, tag = 'scoped memory for tpu_custom_call.1']
    %8 = vsyncpa [#allocation3], 0
    // Predicated region
    $region2: #{tpu_custom_call.1} parent=1 // pred_check
      _
    $region3: #{tpu_custom_call.1} parent=1 // pred_check_branch
      %10 = sbr.rel (0) target = $region5
    $region4: #{tpu_custom_call.1} parent=1 // pred_region
      _
    $region5: #{tpu_custom_call.1} parent=1 // pred_fallthru
      _
    // Predicated region
    $region6: #{tpu_custom_call.1} parent=1 // pred_check
      _
    $region7: #{tpu_custom_call.1} parent=1 // pred_check_branch
      %12 = sbr.rel (0) target = $region9
    $region8: #{tpu_custom_call.1} parent=1 // pred_region
      %s14 = ssub.s32 128, 128
      %15 = vsyncadd [#allocation3], %s14
      %s17 = sshll.u32 [#allocation2], 4
      %s18 = int_to_ptr.vmem [resolvable:$true] %s17
      %20 = dma.hbm_to_vmem [thread:$0]  %s1, 128, %s18, [#allocation3]
    $region9: #{tpu_custom_call.1} parent=1 // pred_fallthru
      _
    // Predicated region
    $region10: #{tpu_custom_call.1} parent=1 // pred_check
      _
    $region11: #{tpu_custom_call.1} parent=1 // pred_check_branch
      %22 = sbr.rel (0) target = $region13
    $region12: #{tpu_custom_call.1} parent=1 // pred_region
      _
    $region13: #{tpu_custom_call.1} parent=1 // pred_fallthru
      _
    // Predicated region
    $region14: #{tpu_custom_call.1} parent=1 // pred_check
      _
    $region15: #{tpu_custom_call.1} parent=1 // pred_check_branch
      %24 = sbr.rel (0) target = $region17
    $region16: #{tpu_custom_call.1} parent=1 // pred_region
      %25 = dma.done [#allocation3], 128
    $region17: #{tpu_custom_call.1} parent=1 // pred_fallthru
      _
    %v26 = vld [vmem:[%s0] sm:$0xff]
    %v27 = vld [vmem:[#allocation2] sm:$0xff]
    %v28 = vsub.f32 %v27, %v26
    %v29 = vmul.f32 %v28, %v28
    %vm30 = vcmask 261120
    %v31 = vsel %vm30, %v29, 0.0
    %32 = vadd.xlane.f32.xlu0 %v31
    %v33 = vpop.xlane.xlu0 %32
    %v34 = vld [vmem:[%s2] sm:$0xff]
    %v35 = vadd.f32 %v33, 1e-09
    %v36 = vrsqrt.pop %v35
    %v37 = vmul.f32 %v35, %v36
    %vm38 = vcmp.eq.f32.partialorder %v35, inf
    %v39 = vsel %vm38, %v35, %v37
    %vm40 = vcmp.eq.f32.partialorder %v35, 0.0
    %v41 = vand.u32 %v35, 2147483648
    %v42 = vsel %vm40, %v41, %v39
    %v43 = vsub.f32 1.0, %v42
    %v44 = vmax.f32 %v43, 0.0
    %v45 = vmul.f32 %v34, %v33
    %v46 = vsub.f32 1.0, %v34
    %v47 = vmul.f32 %v46, %v44
    %v48 = vmul.f32 %v47, %v44
    %v49 = vadd.f32 %v45, %v48
    %v50 = vmul.f32 %v49, 0.5
    %s51 = smul.u32 0, 8
    %v52 = vlaneseq
    %v53 = vshrl.u32 %v52, 7
    %v54 = vstv %s51
    %v55 = vadd.s32 %v54, %v53
    %vm56 = vcmp.lt.s32.totalorder %v55, 8
    %v57 = vsel %vm56, %v50, 0.0
    %vm58 = vcmask 7168
    %59 = vst.msk [vmem:[%s3] sm:$0xff] %vm58, %v57
    // Predicated region
    $region18: #{tpu_custom_call.1} parent=1 // pred_check
      _
    $region19: #{tpu_custom_call.1} parent=1 // pred_check_branch
      %61 = sbr.rel (0) target = $region21
    $region20: #{tpu_custom_call.1} parent=1 // pred_region
      _
    $region21: #{tpu_custom_call.1} parent=1 // pred_fallthru
      _
    // Predicated region
    $region22: #{tpu_custom_call.1} parent=1 // pred_check
      _
    $region23: #{tpu_custom_call.1} parent=1 // pred_check_branch
      %63 = sbr.rel (0) target = $region25
    $region24: #{tpu_custom_call.1} parent=1 // pred_region
      _
    $region25: #{tpu_custom_call.1} parent=1 // pred_fallthru
      _
    %64 = vsyncpa [#allocation3], 1

</llo_original>
